<compile_context>
chip_gen: v6e
topology: v6e:2x2x1
jax: 0.10.0
libtpu: 0.0.40
codegen_flags: <defaults>
</compile_context>

<pallas_src>
import functools
import math

import jax
import jax.numpy as jnp
from jax.experimental import pallas as pl
from jax.experimental.pallas import tpu as pltpu

_BN_EPS = 1e-5
_VMEM_LIMIT = 48 * 1024 * 1024  # fits v7x (64 MiB physical) as well as v5e/v6e
_TM = 128                        # row tile (M) used everywhere; 128 also matches v5e MXU


def _ru(x, m):
    return (x + m - 1) // m * m


# ----------------------------- Pallas kernels --------------------------------

def _matmul_bias_kernel(a_ref, w_ref, b_ref, o_ref, acc_ref, *, relu):
    """Tiled matmul with K-axis accumulation and fused bias (+ReLU) epilogue.

    BN scale is pre-folded into the weights, so the epilogue is add + (optional) ReLU.
    """
    @pl.when(pl.program_id(2) == 0)
    def _():
        acc_ref[...] = jnp.zeros_like(acc_ref)

    acc_ref[...] += jnp.dot(a_ref[...], w_ref[...],
                            preferred_element_type=jnp.float32)

    @pl.when(pl.program_id(2) == pl.num_programs(2) - 1)
    def _():
        y = acc_ref[...] + b_ref[...]
        if relu:
            y = jnp.maximum(y, 0.0)
        o_ref[...] = y.astype(o_ref.dtype)


def _conv3x3_s1_kernel(*refs, shifts, tm, has_residual, relu):
    """3x3 stride-1 conv without im2col.

    The flattened, spatially padded input lives in HBM (pl.ANY); each of the 9 taps
    is the same row block shifted by a constant, DMA'd into a double-buffered VMEM
    scratch and accumulated on the MXU.  Bias (+ residual) + ReLU fused in the epilogue
    (BN scale already folded into the tap weights).
    """
    if has_residual:
        x_hbm, w_ref, b_ref, r_ref, o_ref, abuf, acc_ref, sem = refs
    else:
        x_hbm, w_ref, b_ref, o_ref, abuf, acc_ref, sem = refs
        r_ref = None

    base = pl.program_id(0) * tm
    n_taps = len(shifts)

    def make_cp(t, slot):
        return pltpu.make_async_copy(
            x_hbm.at[pl.ds(base + shifts[t], tm), :],
            abuf.at[slot],
            sem.at[slot])

    cps = [make_cp(0, 0)]
    cps[0].start()
    for t in range(n_taps):                      # static unroll over the 9 taps
        slot = t & 1
        cps[t].wait()
        if t + 1 < n_taps:
            nxt = make_cp(t + 1, 1 - slot)
            nxt.start()
            cps.append(nxt)
        contrib = jnp.dot(abuf[slot], w_ref[t],
                          preferred_element_type=jnp.float32)
        if t == 0:
            acc_ref[...] = contrib
        else:
            acc_ref[...] += contrib

    y = acc_ref[...] + b_ref[...]
    if has_residual:
        y = y + r_ref[...].astype(jnp.float32)
    if relu:
        y = jnp.maximum(y, 0.0)
    o_ref[...] = y.astype(o_ref.dtype)


def _maxpool_kernel(*refs):
    o_ref = refs[-1]
    taps = refs[:-1]
    m = taps[0][...]
    for t in taps[1:]:
        m = jnp.maximum(m, t[...])
    o_ref[...] = m


# ----------------------------- Pallas wrappers --------------------------------

def matmul_bias_pallas(a, w, bias, *, relu):
    """out = act(a @ w + bias); a:(M,K) w:(K,OC); bf16 MXU, f32 accum."""
    M, K = a.shape
    _, OC = w.shape

    Mp = _ru(M, _TM)
    Kp = _ru(K, 128)
    TK = 128
    for t in (512, 256, 128):                    # largest K tile dividing padded K
        if Kp % t == 0:
            TK = t
            break
    if OC % 256 == 0:
        TN = 256
    elif OC % 128 == 0:
        TN = 128
    else:
        TN = OC                                  # OC is 64 only for the stem

    a_p = jnp.pad(a.astype(jnp.bfloat16), ((0, Mp - M), (0, Kp - K)))
    w_p = jnp.pad(w.astype(jnp.bfloat16), ((0, Kp - K), (0, 0)))
    b2 = bias.astype(jnp.float32).reshape(1, OC)

    grid = (Mp // _TM, OC // TN, Kp // TK)

    out = pl.pallas_call(
        functools.partial(_matmul_bias_kernel, relu=relu),
        grid=grid,
        in_specs=[
            pl.BlockSpec((_TM, TK), lambda i, j, k: (i, k)),
            pl.BlockSpec((TK, TN), lambda i, j, k: (k, j)),
            pl.BlockSpec((1, TN), lambda i, j, k: (0, j)),
        ],
        out_specs=pl.BlockSpec((_TM, TN), lambda i, j, k: (i, j)),
        out_shape=jax.ShapeDtypeStruct((Mp, OC), jnp.bfloat16),
        scratch_shapes=[pltpu.VMEM((_TM, TN), jnp.float32)],
        compiler_params=pltpu.CompilerParams(
            dimension_semantics=("parallel", "parallel", "arbitrary"),
            vmem_limit_bytes=_VMEM_LIMIT),
    )(a_p, w_p, b2)
    return out[:M]


def _bn_scale_bias(bn):
    scale = bn['gamma'] / jnp.sqrt(bn['var'] + _BN_EPS)
    bias = bn['beta'] - bn['mean'] * scale
    return scale.astype(jnp.float32), bias.astype(jnp.float32)


def conv3x3_s1_bn_pallas(x, w_oihw, bn, *, relu, residual=None):
    """Fused 3x3 stride-1 conv + BN (+residual) (+ReLU) without materialized im2col."""
    n, h, w, c = x.shape
    oc = w_oihw.shape[0]
    Hp, Wp = h + 2, w + 2
    m_rows = n * Hp * Wp
    Mp = _ru(m_rows, _TM)
    G = Wp + 1                      # max |row shift| of a 3x3 tap in padded coords

    # Spatially zero-padded input, flattened to rows, plus zero guard bands so every
    # shifted DMA window stays in-bounds.
    xp = jnp.pad(x.astype(jnp.bfloat16), ((0, 0), (1, 1), (1, 1), (0, 0)))
    xf = xp.reshape(m_rows, c)
    xfg = jnp.pad(xf, ((G, (Mp - m_rows) + G), (0, 0)))   # (Mp + 2G, C)

    # Per-tap row shift (includes the +G guard offset); tap order = (di, dj) row-major,
    # matching the (KH, KW, IC, OC) weight layout below.
    shifts = tuple(G + (di - 1) * Wp + (dj - 1)
                   for di in range(3) for dj in range(3))

    scale, bias = _bn_scale_bias(bn)
    wt = jnp.transpose(w_oihw, (2, 3, 1, 0)).reshape(9, c, oc)
    wt = (wt * scale.reshape(1, 1, oc)).astype(jnp.bfloat16)   # BN scale folded in
    b2 = bias.reshape(1, oc)

    in_specs = [
        pl.BlockSpec(memory_space=pl.ANY),                 # flattened input stays in HBM
        pl.BlockSpec((9, c, oc), lambda i: (0, 0, 0)),     # all 9 tap weights resident
        pl.BlockSpec((1, oc), lambda i: (0, 0)),
    ]
    args = [xfg, wt, b2]

    has_res = residual is not None
    if has_res:
        # Residual brought into the same padded-coordinate row layout (zero border).
        rp = jnp.pad(residual.astype(jnp.bfloat16), ((0, 0), (1, 1), (1, 1), (0, 0)))
        rf = jnp.pad(rp.reshape(m_rows, oc), ((0, Mp - m_rows), (0, 0)))
        in_specs.append(pl.BlockSpec((_TM, oc), lambda i: (i, 0)))
        args.append(rf)

    kernel = functools.partial(_conv3x3_s1_kernel, shifts=shifts, tm=_TM,
                               has_residual=has_res, relu=relu)
    out = pl.pallas_call(
        kernel,
        grid=(Mp // _TM,),
        in_specs=in_specs,
        out_specs=pl.BlockSpec((_TM, oc), lambda i: (i, 0)),
        out_shape=jax.ShapeDtypeStruct((Mp, oc), jnp.bfloat16),
        scratch_shapes=[
            pltpu.VMEM((2, _TM, c), jnp.bfloat16),   # double-buffered tap tiles
            pltpu.VMEM((_TM, oc), jnp.float32),      # f32 accumulator
            pltpu.SemaphoreType.DMA((2,)),
        ],
        compiler_params=pltpu.CompilerParams(
            dimension_semantics=("parallel",),
            vmem_limit_bytes=_VMEM_LIMIT),
    )(*args)

    # Drop padded-coordinate border rows (they hold don't-care values).
    out = out[:m_rows].reshape(n, Hp, Wp, oc)[:, 1:h + 1, 1:w + 1, :]
    return out


def _im2col(x, kh, kw, stride, pad, pad_value=0.0):
    n, h, w, c = x.shape
    xp = jnp.pad(x, ((0, 0), (pad, pad), (pad, pad), (0, 0)),
                 constant_values=pad_value)
    oh = (h + 2 * pad - kh) // stride + 1
    ow = (w + 2 * pad - kw) // stride + 1
    cols = []
    for i in range(kh):
        for j in range(kw):
            cols.append(xp[:, i:i + stride * (oh - 1) + 1:stride,
                            j:j + stride * (ow - 1) + 1:stride, :])
    patches = jnp.concatenate(cols, axis=-1)         # (N, OH, OW, KH*KW*C)
    return patches.reshape(n * oh * ow, kh * kw * c), oh, ow


def conv_bn_im2col_pallas(x, w_oihw, bn, *, stride, pad, relu,
                          pad_value=0.0, extra_bias=None, weight_scale=None):
    """Strided convs (7x7 stem, 3x3 s2, 1x1 downsample) via im2col + tiled matmul."""
    # TODO(synk): im2col patch extraction itself is plain XLA; a strided-DMA Pallas path
    # would avoid the 9x patch materialization for the 3x3 stride-2 convs.
    n = x.shape[0]
    oc, ic, kh, kw = w_oihw.shape
    w_eff = w_oihw if weight_scale is None else w_oihw * weight_scale
    scale, bias = _bn_scale_bias(bn)
    if extra_bias is not None:
        bias = bias + scale * extra_bias
    patches, oh, ow = _im2col(x.astype(jnp.bfloat16), kh, kw, stride, pad, pad_value)
    wmat = jnp.transpose(w_eff, (2, 3, 1, 0)).reshape(kh * kw * ic, oc)
    wmat = wmat * scale.reshape(1, oc)               # BN scale folded into weights
    out = matmul_bias_pallas(patches, wmat, bias, relu=relu)
    return out.reshape(n, oh, ow, oc)


def maxpool_3x3_s2_pallas(x):
    """MaxPool2d(kernel_size=3, stride=2, padding=1) on NHWC (post-ReLU input)."""
    n, h, w, c = x.shape
    oh = (h + 2 - 3) // 2 + 1
    ow = (w + 2 - 3) // 2 + 1
    # Input is post-ReLU (>= 0), so zero padding is equivalent to -inf padding.
    xp = jnp.pad(x, ((0, 0), (1, 1), (1, 1), (0, 0)))
    m = n * oh * ow
    Mp = _ru(m, _TM)
    taps = []
    for i in range(3):
        for j in range(3):
            t = xp[:, i:i + 2 * (oh - 1) + 1:2, j:j + 2 * (ow - 1) + 1:2, :]
            taps.append(jnp.pad(t.reshape(m, c), ((0, Mp - m), (0, 0))))
    out = pl.pallas_call(
        _maxpool_kernel,
        grid=(Mp // _TM,),
        in_specs=[pl.BlockSpec((_TM, c), lambda i: (i, 0))] * 9,
        out_specs=pl.BlockSpec((_TM, c), lambda i: (i, 0)),
        out_shape=jax.ShapeDtypeStruct((Mp, c), x.dtype),
        compiler_params=pltpu.CompilerParams(
            dimension_semantics=("parallel",),
            vmem_limit_bytes=_VMEM_LIMIT),
    )(*taps)
    return out[:m].reshape(n, oh, ow, c)


# ----------------------------- parameter init ---------------------------------

def _conv_init(key, oc, ic, kh, kw):
    # kaiming_normal_(mode='fan_out', nonlinearity='relu')
    fan_out = oc * kh * kw
    std = math.sqrt(2.0 / fan_out)
    return jax.random.normal(key, (oc, ic, kh, kw), jnp.float32) * std


def _bn_init(c):
    return {
        'gamma': jnp.ones((c,), jnp.float32),
        'beta': jnp.zeros((c,), jnp.float32),
        'mean': jnp.zeros((c,), jnp.float32),
        'var': jnp.ones((c,), jnp.float32),
    }


def init_resnet18_encoder_params(key, num_input_images=1):
    keys = iter(jax.random.split(key, 64))
    params = {
        'conv1_w': _conv_init(next(keys), 64, 3 * num_input_images, 7, 7),
        'bn1': _bn_init(64),
    }
    in_planes = 64
    layer_cfg = [(64, 1), (128, 2), (256, 2), (512, 2)]
    for li, (planes, stride) in enumerate(layer_cfg, start=1):
        blocks = []
        for b in range(2):  # resnet18: [2, 2, 2, 2] BasicBlocks
            s = stride if b == 0 else 1
            blk = {
                'conv1_w': _conv_init(next(keys), planes, in_planes, 3, 3),
                'bn1': _bn_init(planes),
                'conv2_w': _conv_init(next(keys), planes, planes, 3, 3),
                'bn2': _bn_init(planes),
                'stride': s,
            }
            if s != 1 or in_planes != planes:
                blk['down_w'] = _conv_init(next(keys), planes, in_planes, 1, 1)
                blk['down_bn'] = _bn_init(planes)
            blocks.append(blk)
            in_planes = planes
        params[f'layer{li}'] = blocks
    return params


# ----------------------------- forward ----------------------------------------

def basic_block(x, blk):
    s = blk['stride']
    if s == 1:
        out = conv3x3_s1_bn_pallas(x, blk['conv1_w'], blk['bn1'], relu=True)
    else:
        out = conv_bn_im2col_pallas(x, blk['conv1_w'], blk['bn1'],
                                    stride=s, pad=1, relu=True)
    if 'down_w' in blk:
        identity = conv_bn_im2col_pallas(x, blk['down_w'], blk['down_bn'],
                                         stride=s, pad=0, relu=False)
    else:
        identity = x
    # fused: relu(bn2(conv2(out)) + identity)
    return conv3x3_s1_bn_pallas(out, blk['conv2_w'], blk['bn2'],
                                relu=True, residual=identity)


def resnet_encoder_forward(input_image_nchw, params):
    """Replicates ResnetEncoder.forward; returns list of 5 NCHW feature maps."""
    x = jnp.transpose(input_image_nchw, (0, 2, 3, 1)).astype(jnp.float32)  # NHWC

    # (x - 0.45) / 0.225 folded into conv1: scaled weights + extra bias, and the conv
    # padding value becomes 0.45 (which maps to 0 after normalization).
    w1 = params['conv1_w']
    b_fold = -(0.45 / 0.225) * jnp.sum(w1, axis=(1, 2, 3))
    f0 = conv_bn_im2col_pallas(x, w1, params['bn1'], stride=2, pad=3, relu=True,
                               pad_value=0.45, extra_bias=b_fold,
                               weight_scale=1.0 / 0.225)

    feats_nhwc = [f0]
    x = maxpool_3x3_s2_pallas(f0)
    for li in range(1, 5):
        for blk in params[f'layer{li}']:
            x = basic_block(x, blk)
        feats_nhwc.append(x)

    # back to NCHW, f32 (activations flow as bf16 internally)
    return [jnp.transpose(f, (0, 3, 1, 2)).astype(jnp.float32) for f in feats_nhwc]


# ----------------------------- main --------------------------------------------

if __name__ == "__main__":
    key = jax.random.PRNGKey(0)
    pkey, xkey = jax.random.split(key)

    params = init_resnet18_encoder_params(pkey, num_input_images=1)
    # Small input consistent with the module: batch=2, 3 channels (RGB), 16x16 spatial.
    x = jax.random.uniform(xkey, (2, 3, 16, 16), jnp.float32)

    feats = resnet_encoder_forward(x, params)
    feats = jax.block_until_ready(feats)

    expected_channels = [64, 64, 128, 256, 512]
    assert [int(f.shape[1]) for f in feats] == expected_channels, \
        [f.shape for f in feats]
    assert all(bool(jnp.all(jnp.isfinite(f))) for f in feats)
    print("KERNEL_OK")
</pallas_src>

<mosaic_0001>
module attributes {stable_mosaic.version = 11 : i64} {
  func.func @_matmul_bias_kernel(%arg0: i32, %arg1: i32, %arg2: i32, %arg3: memref<128x256xbf16, #tpu.memory_space<vmem>>, %arg4: memref<256x64xbf16, #tpu.memory_space<vmem>>, %arg5: memref<1x64xf32, #tpu.memory_space<vmem>>, %arg6: memref<128x64xbf16, #tpu.memory_space<vmem>>, %arg7: memref<128x64xf32, #tpu.memory_space<vmem>>) attributes {dimension_semantics = [#tpu.dimension_semantics<parallel>, #tpu.dimension_semantics<parallel>, #tpu.dimension_semantics<arbitrary>], iteration_bounds = array<i64: 1, 1, 1>, scalar_prefetch = 0 : i64, scratch_operands = 1 : i64, tpu.core_type = #tpu.core_type<tc>, window_params = [{transform_indices = @transform_0, window_bounds = array<i64: 128, 256>}, {transform_indices = @transform_1, window_bounds = array<i64: 256, 64>}, {transform_indices = @transform_2, window_bounds = array<i64: 1, 64>}, {transform_indices = @transform_3, window_bounds = array<i64: 128, 64>}]} {
    %c0_i32 = arith.constant 0 : i32
    %0 = arith.cmpi eq, %arg2, %c0_i32 : i32
    %1 = arith.extui %0 : i1 to i32
    %c0_i32_0 = arith.constant 0 : i32
    %2 = arith.cmpi ne, %1, %c0_i32_0 : i32
    scf.if %2 {
      %cst_10 = arith.constant 0.000000e+00 : f32
      %12 = vector.broadcast %cst_10 : f32 to vector<128x64xf32>
      %c0_11 = arith.constant 0 : index
      %c0_12 = arith.constant 0 : index
      %13 = vector.load %arg7[%c0_11, %c0_12] : memref<128x64xf32, #tpu.memory_space<vmem>>, vector<128x64xf32>
      tpu.vector_store %arg7[%c0_11, %c0_12], %12 {strides = array<i32>} : memref<128x64xf32, #tpu.memory_space<vmem>>, vector<128x64xf32>,
    } else {
    }
    %c0 = arith.constant 0 : index
    %c0_1 = arith.constant 0 : index
    %3 = vector.load %arg7[%c0, %c0_1] : memref<128x64xf32, #tpu.memory_space<vmem>>, vector<128x64xf32>
    %c0_2 = arith.constant 0 : index
    %c0_3 = arith.constant 0 : index
    %4 = vector.load %arg3[%c0_2, %c0_3] : memref<128x256xbf16, #tpu.memory_space<vmem>>, vector<128x256xbf16>
    %c0_4 = arith.constant 0 : index
    %c0_5 = arith.constant 0 : index
    %5 = vector.load %arg4[%c0_4, %c0_5] : memref<256x64xbf16, #tpu.memory_space<vmem>>, vector<256x64xbf16>
    %cst = arith.constant dense<0.000000e+00> : vector<128x64xf32>
    %6 = tpu.matmul %4, %5, %cst {dimension_numbers = #tpu.dot_dimension_numbers<[1], [0], [0], [1], [0, 0, 1, 1], [], []>} : vector<128x256xbf16>, vector<256x64xbf16>, vector<128x64xf32> -> vector<128x64xf32>
    %7 = arith.addf %3, %6 : vector<128x64xf32>
    %c0_6 = arith.constant 0 : index
    %c0_7 = arith.constant 0 : index
    %8 = vector.load %arg7[%c0_6, %c0_7] : memref<128x64xf32, #tpu.memory_space<vmem>>, vector<128x64xf32>
    tpu.vector_store %arg7[%c0_6, %c0_7], %7 {strides = array<i32>} : memref<128x64xf32, #tpu.memory_space<vmem>>, vector<128x64xf32>,
    %c0_i32_8 = arith.constant 0 : i32
    %9 = arith.cmpi eq, %arg2, %c0_i32_8 : i32
    %10 = arith.extui %9 : i1 to i32
    %c0_i32_9 = arith.constant 0 : i32
    %11 = arith.cmpi ne, %10, %c0_i32_9 : i32
    scf.if %11 {
      %c0_10 = arith.constant 0 : index
      %c0_11 = arith.constant 0 : index
      %12 = vector.load %arg7[%c0_10, %c0_11] : memref<128x64xf32, #tpu.memory_space<vmem>>, vector<128x64xf32>
      %c0_12 = arith.constant 0 : index
      %c0_13 = arith.constant 0 : index
      %13 = vector.load %arg5[%c0_12, %c0_13] : memref<1x64xf32, #tpu.memory_space<vmem>>, vector<1x64xf32>
      %14 = vector.broadcast %13 : vector<1x64xf32> to vector<128x64xf32>
      %15 = arith.addf %12, %14 : vector<128x64xf32>
      %cst_14 = arith.constant 0.000000e+00 : f32
      %16 = vector.broadcast %cst_14 : f32 to vector<128x64xf32>
      %17 = arith.maximumf %15, %16 : vector<128x64xf32>
      %18 = arith.truncf %17 : vector<128x64xf32> to vector<128x64xbf16>
      %c0_15 = arith.constant 0 : index
      %c0_16 = arith.constant 0 : index
      %19 = vector.load %arg6[%c0_15, %c0_16] : memref<128x64xbf16, #tpu.memory_space<vmem>>, vector<128x64xbf16>
      tpu.vector_store %arg6[%c0_15, %c0_16], %18 {strides = array<i32>} : memref<128x64xbf16, #tpu.memory_space<vmem>>, vector<128x64xbf16>,
    } else {
    }
    return
  }
  func.func @transform_0(%arg0: i32, %arg1: i32, %arg2: i32) -> (i32, i32) {
    %c0_i32 = arith.constant 0 : i32
    return %arg0, %arg2 : i32, i32
  }
  func.func @transform_1(%arg0: i32, %arg1: i32, %arg2: i32) -> (i32, i32) {
    %c0_i32 = arith.constant 0 : i32
    return %arg2, %arg1 : i32, i32
  }
  func.func @transform_2(%arg0: i32, %arg1: i32, %arg2: i32) -> (i32, i32) {
    %c0_i32 = arith.constant 0 : i32
    %c0_i32_0 = arith.constant 0 : i32
    return %c0_i32, %arg1 : i32, i32
  }
  func.func @transform_3(%arg0: i32, %arg1: i32, %arg2: i32) -> (i32, i32) {
    %c0_i32 = arith.constant 0 : i32
    return %arg0, %arg1 : i32, i32
  }
}

</mosaic_0001>

<llo_original>
// kernel: tpu_custom_call.1
$region0: #{tpu_custom_call.1}
  #allocation0 [shape = 'u32[]', space=smem, size = 0x4, offset = 0x4, fixed_abs, tag = 'smem constant byte address 0x4 - core index']
  #allocation1 [shape = 'u32[144,128]{1,0:T(1,128)}', space=vmem, size = 0x12000, scoped, tag = 'internal scratch']
  #allocation2 [shape = 'f32[128,64]{1,0:T(8,128)}', space=vmem, size = 0x10000, scoped, tag = 'scratch operand']
  %s0 = inlined_call_operand.vmem [shape: bf16[128,256], index: 0, kind: input, shape index: {}]
  %s1 = inlined_call_operand.vmem [shape: bf16[256,64], index: 1, kind: input, shape index: {}]
  %s2 = inlined_call_operand.vmem [shape: f32[1,64], index: 2, kind: input, shape index: {}]
  %s3 = inlined_call_operand.vmem [shape: bf16[128,64], index: 3, kind: output, shape index: {}]
  %s4 = sld [smem:[#allocation0]]
  $region30: #{tpu_custom_call.1} parent=0
    _
  %s6 = ssub.s32 1, %s4
  %s7 = scalar_select 0, %s6, %s4
  // Predicated region
  $region2: #{tpu_custom_call.1} parent=0 // pred_check
    _
  $region3: #{tpu_custom_call.1} parent=0 // pred_check_branch
    %9 = sbr.rel (0) target = $region5
  $region4: #{tpu_custom_call.1} parent=0 // pred_region
    _
  $region5: #{tpu_custom_call.1} parent=0 // pred_fallthru
    _
  // Predicated region
  $region6: #{tpu_custom_call.1} parent=0 // pred_check
    _
  $region7: #{tpu_custom_call.1} parent=0 // pred_check_branch
    %11 = sbr.rel (0) target = $region9
  $region8: #{tpu_custom_call.1} parent=0 // pred_region
    _
  $region9: #{tpu_custom_call.1} parent=0 // pred_fallthru
    _
  // Predicated region
  $region10: #{tpu_custom_call.1} parent=0 // pred_check
    _
  $region11: #{tpu_custom_call.1} parent=0 // pred_check_branch
    %13 = sbr.rel (0) target = $region13
  $region12: #{tpu_custom_call.1} parent=0 // pred_region
    _
  $region13: #{tpu_custom_call.1} parent=0 // pred_fallthru
    _
  %p15 = scmp.eq.s32.totalorder 0, 0
  // Predicated region
  $region14: #{tpu_custom_call.1} parent=0 // pred_check
    %p16 = pneg %p15
  $region15: #{tpu_custom_call.1} parent=0 // pred_check_branch
    %18 = sbr.rel (%p16) target = $region17
  $region16: #{tpu_custom_call.1} parent=0 // pred_region
    %vm19 = vcmask 523264
    %20 = vst.msk [vmem:[#allocation2] sm:$0xff] %vm19, 0.0
    %21 = vst.msk [vmem:[#allocation2 + $0x8] sm:$0xff] %vm19, 0.0
    %22 = vst.msk [vmem:[#allocation2 + $0x10] sm:$0xff] %vm19, 0.0
    %23 = vst.msk [vmem:[#allocation2 + $0x18] sm:$0xff] %vm19, 0.0
    %24 = vst.msk [vmem:[#allocation2 + $0x20] sm:$0xff] %vm19, 0.0
    %25 = vst.msk [vmem:[#allocation2 + $0x28] sm:$0xff] %vm19, 0.0
    %26 = vst.msk [vmem:[#allocation2 + $0x30] sm:$0xff] %vm19, 0.0
    %27 = vst.msk [vmem:[#allocation2 + $0x38] sm:$0xff] %vm19, 0.0
    %28 = vst.msk [vmem:[#allocation2 + $0x40] sm:$0xff] %vm19, 0.0
    %29 = vst.msk [vmem:[#allocation2 + $0x48] sm:$0xff] %vm19, 0.0
    %30 = vst.msk [vmem:[#allocation2 + $0x50] sm:$0xff] %vm19, 0.0
    %31 = vst.msk [vmem:[#allocation2 + $0x58] sm:$0xff] %vm19, 0.0
    %32 = vst.msk [vmem:[#allocation2 + $0x60] sm:$0xff] %vm19, 0.0
    %33 = vst.msk [vmem:[#allocation2 + $0x68] sm:$0xff] %vm19, 0.0
    %34 = vst.msk [vmem:[#allocation2 + $0x70] sm:$0xff] %vm19, 0.0
    %35 = vst.msk [vmem:[#allocation2 + $0x78] sm:$0xff] %vm19, 0.0
  $region17: #{tpu_custom_call.1} parent=0 // pred_fallthru
    _
  %v36 = vld [vmem:[#allocation2] sm:$0xff]
  %v37 = vld [vmem:[#allocation2 + $0x8] sm:$0xff]
  %v38 = vld [vmem:[#allocation2 + $0x10] sm:$0xff]
  %v39 = vld [vmem:[#allocation2 + $0x18] sm:$0xff]
  %v40 = vld [vmem:[#allocation2 + $0x20] sm:$0xff]
  %v41 = vld [vmem:[#allocation2 + $0x28] sm:$0xff]
  %v42 = vld [vmem:[#allocation2 + $0x30] sm:$0xff]
  %v43 = vld [vmem:[#allocation2 + $0x38] sm:$0xff]
  %v44 = vld [vmem:[#allocation2 + $0x40] sm:$0xff]
  %v45 = vld [vmem:[#allocation2 + $0x48] sm:$0xff]
  %v46 = vld [vmem:[#allocation2 + $0x50] sm:$0xff]
  %v47 = vld [vmem:[#allocation2 + $0x58] sm:$0xff]
  %v48 = vld [vmem:[#allocation2 + $0x60] sm:$0xff]
  %v49 = vld [vmem:[#allocation2 + $0x68] sm:$0xff]
  %v50 = vld [vmem:[#allocation2 + $0x70] sm:$0xff]
  %v51 = vld [vmem:[#allocation2 + $0x78] sm:$0xff]
  %v52 = vld [vmem:[%s0] sm:$0xff]
  %v53 = vld [vmem:[%s0 + $0x8] sm:$0xff]
  %v54 = vld [vmem:[%s0 + $0x10] sm:$0xff]
  %v55 = vld [vmem:[%s0 + $0x18] sm:$0xff]
  %v56 = vld [vmem:[%s0 + $0x20] sm:$0xff]
  %v57 = vld [vmem:[%s0 + $0x28] sm:$0xff]
  %v58 = vld [vmem:[%s0 + $0x30] sm:$0xff]
  %v59 = vld [vmem:[%s0 + $0x38] sm:$0xff]
  %v60 = vld [vmem:[%s0 + $0x40] sm:$0xff]
  %v61 = vld [vmem:[%s0 + $0x48] sm:$0xff]
  %v62 = vld [vmem:[%s0 + $0x50] sm:$0xff]
  %v63 = vld [vmem:[%s0 + $0x58] sm:$0xff]
  %v64 = vld [vmem:[%s0 + $0x60] sm:$0xff]
  %v65 = vld [vmem:[%s0 + $0x68] sm:$0xff]
  %v66 = vld [vmem:[%s0 + $0x70] sm:$0xff]
  %v67 = vld [vmem:[%s0 + $0x78] sm:$0xff]
  %v68 = vld [vmem:[%s1] sm:$0xf]
  %v69 = vld [vmem:[%s1 + $0x4] sm:$0xf]
  %v70 = vld [vmem:[%s1 + $0x8] sm:$0xf]
  %v71 = vld [vmem:[%s1 + $0xc] sm:$0xf]
  %v72 = vld [vmem:[%s1 + $0x10] sm:$0xf]
  %v73 = vld [vmem:[%s1 + $0x14] sm:$0xf]
  %v74 = vld [vmem:[%s1 + $0x18] sm:$0xf]
  %v75 = vld [vmem:[%s1 + $0x1c] sm:$0xf]
  %v76 = vld [vmem:[%s1 + $0x20] sm:$0xf]
  %v77 = vld [vmem:[%s1 + $0x24] sm:$0xf]
  %v78 = vld [vmem:[%s1 + $0x28] sm:$0xf]
  %v79 = vld [vmem:[%s1 + $0x2c] sm:$0xf]
  %v80 = vld [vmem:[%s1 + $0x30] sm:$0xf]
  %v81 = vld [vmem:[%s1 + $0x34] sm:$0xf]
  %v82 = vld [vmem:[%s1 + $0x38] sm:$0xf]
  %v83 = vld [vmem:[%s1 + $0x3c] sm:$0xf]
  %v84 = vld [vmem:[%s1 + $0x40] sm:$0xf]
  %v85 = vld [vmem:[%s1 + $0x44] sm:$0xf]
  %v86 = vld [vmem:[%s1 + $0x48] sm:$0xf]
  %v87 = vld [vmem:[%s1 + $0x4c] sm:$0xf]
  %v88 = vld [vmem:[%s1 + $0x50] sm:$0xf]
  %v89 = vld [vmem:[%s1 + $0x54] sm:$0xf]
  %v90 = vld [vmem:[%s1 + $0x58] sm:$0xf]
  %v91 = vld [vmem:[%s1 + $0x5c] sm:$0xf]
  %v92 = vld [vmem:[%s1 + $0x60] sm:$0xf]
  %v93 = vld [vmem:[%s1 + $0x64] sm:$0xf]
  %v94 = vld [vmem:[%s1 + $0x68] sm:$0xf]
  %v95 = vld [vmem:[%s1 + $0x6c] sm:$0xf]
  %v96 = vld [vmem:[%s1 + $0x70] sm:$0xf]
  %v97 = vld [vmem:[%s1 + $0x74] sm:$0xf]
  %v98 = vld [vmem:[%s1 + $0x78] sm:$0xf]
  %v99 = vld [vmem:[%s1 + $0x7c] sm:$0xf]
  %v116 = vunpack.c.l.b16 %v52
  %v117 = vunpack.c.h.b16 %v52
  %v118 = vunpack.c.l.b16 %v53
  %v119 = vunpack.c.h.b16 %v53
  %v120 = vunpack.c.l.b16 %v54
  %v121 = vunpack.c.h.b16 %v54
  %v122 = vunpack.c.l.b16 %v55
  %v123 = vunpack.c.h.b16 %v55
  %v124 = vunpack.c.l.b16 %v56
  %v125 = vunpack.c.h.b16 %v56
  %v126 = vunpack.c.l.b16 %v57
  %v127 = vunpack.c.h.b16 %v57
  %v128 = vunpack.c.l.b16 %v58
  %v129 = vunpack.c.h.b16 %v58
  %v130 = vunpack.c.l.b16 %v59
  %v131 = vunpack.c.h.b16 %v59
  %v132 = vunpack.c.l.b16 %v60
  %v133 = vunpack.c.h.b16 %v60
  %v134 = vunpack.c.l.b16 %v61
  %v135 = vunpack.c.h.b16 %v61
  %v136 = vunpack.c.l.b16 %v62
  %v137 = vunpack.c.h.b16 %v62
  %v138 = vunpack.c.l.b16 %v63
  %v139 = vunpack.c.h.b16 %v63
  %v140 = vunpack.c.l.b16 %v64
  %v141 = vunpack.c.h.b16 %v64
  %v142 = vunpack.c.l.b16 %v65
  %v143 = vunpack.c.h.b16 %v65
  %v144 = vunpack.c.l.b16 %v66
  %v145 = vunpack.c.h.b16 %v66
  %v146 = vunpack.c.l.b16 %v67
  %v147 = vunpack.c.h.b16 %v67
  %v148 = vpack.c.b16 %v118, %v116
  %v149 = vpack.c.b16 %v119, %v117
  %v150 = vpack.c.b16 %v122, %v120
  %v151 = vpack.c.b16 %v123, %v121
  %v152 = vpack.c.b16 %v126, %v124
  %v153 = vpack.c.b16 %v127, %v125
  %v154 = vpack.c.b16 %v130, %v128
  %v155 = vpack.c.b16 %v131, %v129
  %v156 = vpack.c.b16 %v134, %v132
  %v157 = vpack.c.b16 %v135, %v133
  %v158 = vpack.c.b16 %v138, %v136
  %v159 = vpack.c.b16 %v139, %v137
  %v160 = vpack.c.b16 %v142, %v140
  %v161 = vpack.c.b16 %v143, %v141
  %v162 = vpack.c.b16 %v146, %v144
  %v163 = vpack.c.b16 %v147, %v145
  %v212 = vunpack.c.l.b16 %v68
  %v213 = vunpack.c.l.b16 %v69
  %v214 = vunpack.c.l.b16 %v70
  %v215 = vunpack.c.l.b16 %v71
  %v216 = vunpack.c.l.b16 %v72
  %v217 = vunpack.c.l.b16 %v73
  %v218 = vunpack.c.l.b16 %v74
  %v219 = vunpack.c.l.b16 %v75
  %v220 = vunpack.c.l.b16 %v76
  %v221 = vunpack.c.l.b16 %v77
  %v222 = vunpack.c.l.b16 %v78
  %v223 = vunpack.c.l.b16 %v79
  %v224 = vunpack.c.l.b16 %v80
  %v225 = vunpack.c.l.b16 %v81
  %v226 = vunpack.c.l.b16 %v82
  %v227 = vunpack.c.l.b16 %v83
  %v228 = vunpack.c.l.b16 %v84
  %v229 = vunpack.c.l.b16 %v85
  %v230 = vunpack.c.l.b16 %v86
  %v231 = vunpack.c.l.b16 %v87
  %v232 = vunpack.c.l.b16 %v88
  %v233 = vunpack.c.l.b16 %v89
  %v234 = vunpack.c.l.b16 %v90
  %v235 = vunpack.c.l.b16 %v91
  %v236 = vunpack.c.l.b16 %v92
  %v237 = vunpack.c.l.b16 %v93
  %v238 = vunpack.c.l.b16 %v94
  %v239 = vunpack.c.l.b16 %v95
  %v240 = vunpack.c.l.b16 %v96
  %v241 = vunpack.c.l.b16 %v97
  %v242 = vunpack.c.l.b16 %v98
  %v243 = vunpack.c.l.b16 %v99
  %v244 = vpack.c.b16 %v213, %v212
  %v245 = vpack.c.b16 %v215, %v214
  %v246 = vpack.c.b16 %v217, %v216
  %v247 = vpack.c.b16 %v219, %v218
  %v248 = vpack.c.b16 %v221, %v220
  %v249 = vpack.c.b16 %v223, %v222
  %v250 = vpack.c.b16 %v225, %v224
  %v251 = vpack.c.b16 %v227, %v226
  %v252 = vpack.c.b16 %v229, %v228
  %v253 = vpack.c.b16 %v231, %v230
  %v254 = vpack.c.b16 %v233, %v232
  %v255 = vpack.c.b16 %v235, %v234
  %v256 = vpack.c.b16 %v237, %v236
  %v257 = vpack.c.b16 %v239, %v238
  %v258 = vpack.c.b16 %v241, %v240
  %v259 = vpack.c.b16 %v243, %v242
  %276 = vmatprep.subr.bf16.mxu0 0
  %277 = vmatpush1.bf16.msra.mxu0 %v251
  %278 = vmatprep.subr.bf16.mxu0 0
  %279 = vmatpush1.bf16.msra.mxu0 %v250
  %280 = vmatprep.subr.bf16.mxu0 0
  %281 = vmatpush1.bf16.msra.mxu0 %v249
  %282 = vmatprep.subr.bf16.mxu0 0
  %283 = vmatpush1.bf16.msra.mxu0 %v248
  %284 = vmatprep.subr.bf16.mxu0 0
  %285 = vmatpush1.bf16.msra.mxu0 %v247
  %286 = vmatprep.subr.bf16.mxu0 0
  %287 = vmatpush1.bf16.msra.mxu0 %v246
  %288 = vmatprep.subr.bf16.mxu0 0
  %289 = vmatpush1.bf16.msra.mxu0 %v245
  %290 = vmatprep.subr.bf16.mxu0 0
  %291 = vmatpush1.bf16.msra.mxu0 %v244
  %292 = vmatprep.subr.bf16.mxu0 0
  %293 = vmatpush2.bf16.msra.mxu0 %v259
  %294 = vmatprep.subr.bf16.mxu0 0
  %295 = vmatpush2.bf16.msra.mxu0 %v258
  %296 = vmatprep.subr.bf16.mxu0 0
  %297 = vmatpush2.bf16.msra.mxu0 %v257
  %298 = vmatprep.subr.bf16.mxu0 0
  %299 = vmatpush2.bf16.msra.mxu0 %v256
  %300 = vmatprep.subr.bf16.mxu0 0
  %301 = vmatpush2.bf16.msra.mxu0 %v255
  %302 = vmatprep.subr.bf16.mxu0 0
  %303 = vmatpush2.bf16.msra.mxu0 %v254
  %304 = vmatprep.subr.bf16.mxu0 0
  %305 = vmatpush2.bf16.msra.mxu0 %v253
  %306 = vmatprep.subr.bf16.mxu0 0
  %307 = vmatpush2.bf16.msra.mxu0 %v252
  %308 = vmatprep.mubr.bf16.mxu0 %v149
  %309 = vmatmul.mubr.bf16.gmra.mxu0 %v148
  %v310 = vpop.f32.mrf.mxu0
  %v311 = vadd.f32 0.0, %v310
  %v312 = vpop.f32.mrf.mxu0
  %v313 = vpop.f32.mrf.mxu0
  %v314 = vadd.f32 0.0, %v313
  %v315 = vpop.f32.mrf.mxu0
  %316 = vmatprep.mubr.bf16.mxu0 %v151
  %317 = vmatmul.mubr.bf16.gmra.mxu0 %v150
  %v318 = vpop.f32.mrf.mxu0
  %v319 = vadd.f32 0.0, %v318
  %v320 = vpop.f32.mrf.mxu0
  %v321 = vpop.f32.mrf.mxu0
  %v322 = vadd.f32 0.0, %v321
  %v323 = vpop.f32.mrf.mxu0
  %324 = vmatprep.mubr.bf16.mxu0 %v153
  %325 = vmatmul.mubr.bf16.gmra.mxu0 %v152
  %v326 = vpop.f32.mrf.mxu0
  %v327 = vadd.f32 0.0, %v326
  %v328 = vpop.f32.mrf.mxu0
  %v329 = vpop.f32.mrf.mxu0
  %v330 = vadd.f32 0.0, %v329
  %v331 = vpop.f32.mrf.mxu0
  %332 = vmatprep.mubr.bf16.mxu0 %v155
  %333 = vmatmul.mubr.bf16.gmra.mxu0 %v154
  %v334 = vpop.f32.mrf.mxu0
  %v335 = vadd.f32 0.0, %v334
  %v336 = vpop.f32.mrf.mxu0
  %v337 = vpop.f32.mrf.mxu0
  %v338 = vadd.f32 0.0, %v337
  %v339 = vpop.f32.mrf.mxu0
  %340 = vmatprep.mubr.bf16.mxu0 %v157
  %341 = vmatmul.mubr.bf16.gmra.mxu0 %v156
  %v342 = vpop.f32.mrf.mxu0
  %v343 = vadd.f32 0.0, %v342
  %v344 = vpop.f32.mrf.mxu0
  %v345 = vpop.f32.mrf.mxu0
  %v346 = vadd.f32 0.0, %v345
  %v347 = vpop.f32.mrf.mxu0
  %348 = vmatprep.mubr.bf16.mxu0 %v159
  %349 = vmatmul.mubr.bf16.gmra.mxu0 %v158
  %v350 = vpop.f32.mrf.mxu0
  %v351 = vadd.f32 0.0, %v350
  %v352 = vpop.f32.mrf.mxu0
  %v353 = vpop.f32.mrf.mxu0
  %v354 = vadd.f32 0.0, %v353
  %v355 = vpop.f32.mrf.mxu0
  %356 = vmatprep.mubr.bf16.mxu0 %v161
  %357 = vmatmul.mubr.bf16.gmra.mxu0 %v160
  %v358 = vpop.f32.mrf.mxu0
  %v359 = vadd.f32 0.0, %v358
  %v360 = vpop.f32.mrf.mxu0
  %v361 = vpop.f32.mrf.mxu0
  %v362 = vadd.f32 0.0, %v361
  %v363 = vpop.f32.mrf.mxu0
  %364 = vmatprep.mubr.bf16.mxu0 %v163
  %365 = vmatmul.mubr.bf16.gmra.mxu0 %v162
  %v366 = vpop.f32.mrf.mxu0
  %v367 = vadd.f32 0.0, %v366
  %v368 = vpop.f32.mrf.mxu0
  %v369 = vpop.f32.mrf.mxu0
  %v370 = vadd.f32 0.0, %v369
  %v371 = vpop.f32.mrf.mxu0
  %372 = vdwg.mxu0
  %v373 = vadd.f32 %v36, %v311
  %v374 = vadd.f32 %v37, %v314
  %v375 = vadd.f32 %v38, %v319
  %v376 = vadd.f32 %v39, %v322
  %v377 = vadd.f32 %v40, %v327
  %v378 = vadd.f32 %v41, %v330
  %v379 = vadd.f32 %v42, %v335
  %v380 = vadd.f32 %v43, %v338
  %v381 = vadd.f32 %v44, %v343
  %v382 = vadd.f32 %v45, %v346
  %v383 = vadd.f32 %v46, %v351
  %v384 = vadd.f32 %v47, %v354
  %v385 = vadd.f32 %v48, %v359
  %v386 = vadd.f32 %v49, %v362
  %v387 = vadd.f32 %v50, %v367
  %v388 = vadd.f32 %v51, %v370
  %vm389 = vcmask 523264
  %390 = vst.msk [vmem:[#allocation2] sm:$0xff] %vm389, %v373
  %391 = vst.msk [vmem:[#allocation2 + $0x8] sm:$0xff] %vm389, %v374
  %392 = vst.msk [vmem:[#allocation2 + $0x10] sm:$0xff] %vm389, %v375
  %393 = vst.msk [vmem:[#allocation2 + $0x18] sm:$0xff] %vm389, %v376
  %394 = vst.msk [vmem:[#allocation2 + $0x20] sm:$0xff] %vm389, %v377
  %395 = vst.msk [vmem:[#allocation2 + $0x28] sm:$0xff] %vm389, %v378
  %396 = vst.msk [vmem:[#allocation2 + $0x30] sm:$0xff] %vm389, %v379
  %397 = vst.msk [vmem:[#allocation2 + $0x38] sm:$0xff] %vm389, %v380
  %398 = vst.msk [vmem:[#allocation2 + $0x40] sm:$0xff] %vm389, %v381
  %399 = vst.msk [vmem:[#allocation2 + $0x48] sm:$0xff] %vm389, %v382
  %400 = vst.msk [vmem:[#allocation2 + $0x50] sm:$0xff] %vm389, %v383
  %401 = vst.msk [vmem:[#allocation2 + $0x58] sm:$0xff] %vm389, %v384
  %402 = vst.msk [vmem:[#allocation2 + $0x60] sm:$0xff] %vm389, %v385
  %403 = vst.msk [vmem:[#allocation2 + $0x68] sm:$0xff] %vm389, %v386
  %404 = vst.msk [vmem:[#allocation2 + $0x70] sm:$0xff] %vm389, %v387
  %405 = vst.msk [vmem:[#allocation2 + $0x78] sm:$0xff] %vm389, %v388
  // Predicated region
  $region18: #{tpu_custom_call.1} parent=0 // pred_check
    %p406 = pneg %p15
  $region19: #{tpu_custom_call.1} parent=0 // pred_check_branch
    %408 = sbr.rel (%p406) target = $region21
  $region20: #{tpu_custom_call.1} parent=0 // pred_region
    %v409 = vld [vmem:[#allocation2] sm:$0xff]
    %v410 = vld [vmem:[#allocation2 + $0x8] sm:$0xff]
    %v411 = vld [vmem:[#allocation2 + $0x10] sm:$0xff]
    %v412 = vld [vmem:[#allocation2 + $0x18] sm:$0xff]
    %v413 = vld [vmem:[#allocation2 + $0x20] sm:$0xff]
    %v414 = vld [vmem:[#allocation2 + $0x28] sm:$0xff]
    %v415 = vld [vmem:[#allocation2 + $0x30] sm:$0xff]
    %v416 = vld [vmem:[#allocation2 + $0x38] sm:$0xff]
    %v417 = vld [vmem:[#allocation2 + $0x40] sm:$0xff]
    %v418 = vld [vmem:[#allocation2 + $0x48] sm:$0xff]
    %v419 = vld [vmem:[#allocation2 + $0x50] sm:$0xff]
    %v420 = vld [vmem:[#allocation2 + $0x58] sm:$0xff]
    %v421 = vld [vmem:[#allocation2 + $0x60] sm:$0xff]
    %v422 = vld [vmem:[#allocation2 + $0x68] sm:$0xff]
    %v423 = vld [vmem:[#allocation2 + $0x70] sm:$0xff]
    %v424 = vld [vmem:[#allocation2 + $0x78] sm:$0xff]
    %v425 = vld [vmem:[%s2] sm:$0x1]
    %v427 = vlaneseq
    %v428 = vshrl.u32 %v427, 7
    %v429 = vsub.s32 0, %v428
    %v430 = vrot.slane %v425, %v429
    %v432 = vadd.f32 %v409, %v430
    %v433 = vadd.f32 %v410, %v430
    %v434 = vadd.f32 %v411, %v430
    %v435 = vadd.f32 %v412, %v430
    %v436 = vadd.f32 %v413, %v430
    %v437 = vadd.f32 %v414, %v430
    %v438 = vadd.f32 %v415, %v430
    %v439 = vadd.f32 %v416, %v430
    %v440 = vadd.f32 %v417, %v430
    %v441 = vadd.f32 %v418, %v430
    %v442 = vadd.f32 %v419, %v430
    %v443 = vadd.f32 %v420, %v430
    %v444 = vadd.f32 %v421, %v430
    %v445 = vadd.f32 %v422, %v430
    %v446 = vadd.f32 %v423, %v430
    %v447 = vadd.f32 %v424, %v430
    %v448 = vmax.f32 %v432, 0.0
    %v449 = vmax.f32 %v433, 0.0
    %v450 = vmax.f32 %v434, 0.0
    %v451 = vmax.f32 %v435, 0.0
    %v452 = vmax.f32 %v436, 0.0
    %v453 = vmax.f32 %v437, 0.0
    %v454 = vmax.f32 %v438, 0.0
    %v455 = vmax.f32 %v439, 0.0
    %v456 = vmax.f32 %v440, 0.0
    %v457 = vmax.f32 %v441, 0.0
    %v458 = vmax.f32 %v442, 0.0
    %v459 = vmax.f32 %v443, 0.0
    %v460 = vmax.f32 %v444, 0.0
    %v461 = vmax.f32 %v445, 0.0
    %v462 = vmax.f32 %v446, 0.0
    %v463 = vmax.f32 %v447, 0.0
    %v464 = vpack.c.bf16 %v449, %v448
    %v465 = vpack.c.bf16 %v451, %v450
    %v466 = vpack.c.bf16 %v453, %v452
    %v467 = vpack.c.bf16 %v455, %v454
    %v468 = vpack.c.bf16 %v457, %v456
    %v469 = vpack.c.bf16 %v459, %v458
    %v470 = vpack.c.bf16 %v461, %v460
    %v471 = vpack.c.bf16 %v463, %v462
    %v480 = vunpack.c.l.b16 %v464
    %v481 = vunpack.c.h.b16 %v464
    %v482 = vunpack.c.l.b16 %v465
    %v483 = vunpack.c.h.b16 %v465
    %v484 = vunpack.c.l.b16 %v466
    %v485 = vunpack.c.h.b16 %v466
    %v486 = vunpack.c.l.b16 %v467
    %v487 = vunpack.c.h.b16 %v467
    %v488 = vunpack.c.l.b16 %v468
    %v489 = vunpack.c.h.b16 %v468
    %v490 = vunpack.c.l.b16 %v469
    %v491 = vunpack.c.h.b16 %v469
    %v492 = vunpack.c.l.b16 %v470
    %v493 = vunpack.c.h.b16 %v470
    %v494 = vunpack.c.l.b16 %v471
    %v495 = vunpack.c.h.b16 %v471
    %v496 = vpack.c.b16 %v480, %v480
    %v497 = vpack.c.b16 %v481, %v481
    %v498 = vpack.c.b16 %v482, %v482
    %v499 = vpack.c.b16 %v483, %v483
    %v500 = vpack.c.b16 %v484, %v484
    %v501 = vpack.c.b16 %v485, %v485
    %v502 = vpack.c.b16 %v486, %v486
    %v503 = vpack.c.b16 %v487, %v487
    %v504 = vpack.c.b16 %v488, %v488
    %v505 = vpack.c.b16 %v489, %v489
    %v506 = vpack.c.b16 %v490, %v490
    %v507 = vpack.c.b16 %v491, %v491
    %v508 = vpack.c.b16 %v492, %v492
    %v509 = vpack.c.b16 %v493, %v493
    %v510 = vpack.c.b16 %v494, %v494
    %v511 = vpack.c.b16 %v495, %v495
    %vm528 = vcmask 519168
    %529 = vst.msk [vmem:[%s3] sm:$0xf] %vm528, %v496
    %530 = vst.msk [vmem:[%s3 + $0x4] sm:$0xf] %vm528, %v497
    %531 = vst.msk [vmem:[%s3 + $0x8] sm:$0xf] %vm528, %v498
    %532 = vst.msk [vmem:[%s3 + $0xc] sm:$0xf] %vm528, %v499
    %533 = vst.msk [vmem:[%s3 + $0x10] sm:$0xf] %vm528, %v500
    %534 = vst.msk [vmem:[%s3 + $0x14] sm:$0xf] %vm528, %v501
    %535 = vst.msk [vmem:[%s3 + $0x18] sm:$0xf] %vm528, %v502
    %536 = vst.msk [vmem:[%s3 + $0x1c] sm:$0xf] %vm528, %v503
    %537 = vst.msk [vmem:[%s3 + $0x20] sm:$0xf] %vm528, %v504
    %538 = vst.msk [vmem:[%s3 + $0x24] sm:$0xf] %vm528, %v505
    %539 = vst.msk [vmem:[%s3 + $0x28] sm:$0xf] %vm528, %v506
    %540 = vst.msk [vmem:[%s3 + $0x2c] sm:$0xf] %vm528, %v507
    %541 = vst.msk [vmem:[%s3 + $0x30] sm:$0xf] %vm528, %v508
    %542 = vst.msk [vmem:[%s3 + $0x34] sm:$0xf] %vm528, %v509
    %543 = vst.msk [vmem:[%s3 + $0x38] sm:$0xf] %vm528, %v510
    %544 = vst.msk [vmem:[%s3 + $0x3c] sm:$0xf] %vm528, %v511
  $region21: #{tpu_custom_call.1} parent=0 // pred_fallthru
    _
  // Predicated region
  $region22: #{tpu_custom_call.1} parent=0 // pred_check
    _
  $region23: #{tpu_custom_call.1} parent=0 // pred_check_branch
    %546 = sbr.rel (0) target = $region25
  $region24: #{tpu_custom_call.1} parent=0 // pred_region
    _
  $region25: #{tpu_custom_call.1} parent=0 // pred_fallthru
    _
  // Predicated region
  $region26: #{tpu_custom_call.1} parent=0 // pred_check
    _
  $region27: #{tpu_custom_call.1} parent=0 // pred_check_branch
    %548 = sbr.rel (0) target = $region29
  $region28: #{tpu_custom_call.1} parent=0 // pred_region
    _
  $region29: #{tpu_custom_call.1} parent=0 // pred_fallthru
    _

</llo_original>
